<compile_context>
chip_gen: v7x
topology: tpu7x:2x2x1
jax: 0.10.0
libtpu: 0.0.40
codegen_flags: <defaults>
</compile_context>

<pallas_src>
import math

import jax
import jax.numpy as jnp
from jax.experimental import pallas as pl
from jax.experimental.pallas import tpu as pltpu


def _locked_dropout_kernel(mask_ref, x_ref, o_ref):
    # mask_ref: (1, Ct) resident mask slice (sublane-broadcast on multiply);
    # x_ref / o_ref: (Tt, Ct) tiles.  Pure load-mul-store in x.dtype.
    o_ref[...] = x_ref[...] * mask_ref[...]


def locked_dropout(x, *, p: float, key, training: bool = True,
                   donate_x: bool = False):
    """LockedDropout with locked_dim=0 (time axis); x has shape (T, ...)."""
    assert 0.0 <= p <= 1.0
    if (not training) or p == 0.0:
        return x
    if p == 1.0:
        # mask is all zeros; PyTorch skips the 1/(1-p) rescale in this case.
        return jnp.zeros_like(x)

    keep_prob = 1.0 - p
    T = x.shape[0]
    C = math.prod(x.shape[1:]) if x.ndim > 1 else 1
    x2 = x.reshape(T, C)

    # Mask hoisted out of the kernel: values in {0, 1/keep_prob}, kept in
    # x.dtype so the kernel multiply stays in the native dtype (no casts).
    keep = jax.random.bernoulli(key, keep_prob, (1, C))
    mask = keep.astype(x.dtype) * jnp.asarray(1.0 / keep_prob, dtype=x.dtype)

    itemsize = jnp.dtype(x.dtype).itemsize
    sub = max(8, (8 * 4) // itemsize)          # sublane pack: 8 f32, 16 bf16, 32 i8

    # Pad the lane dimension to a multiple of 128 -> unmasked full-lane stores.
    C_pad = 128 * pl.cdiv(C, 128)
    if C_pad != C:
        x2 = jnp.pad(x2, ((0, 0), (0, C_pad - C)))
        mask = jnp.pad(mask, ((0, 0), (0, C_pad - C)))

    # --- tile sizing: ~2 MiB per x/out buffer (fits v5e's 16 MiB scoped
    # default with double buffering), lane tile a multiple of 128, time tile a
    # multiple of the dtype sublane pack, and enough grid steps for pipelining
    # / megacore when T allows. ---
    target_bytes = 2 * 1024 * 1024
    if sub * C_pad * itemsize > target_bytes:
        ct = max(128, (target_bytes // (sub * itemsize) // 128) * 128)
        ct = min(ct, C_pad)
    else:
        ct = C_pad
    bytes_per_row = ct * itemsize
    tt = max(sub, (target_bytes // bytes_per_row // sub) * sub)
    # Cap tt so the T axis has >= ~4 grid steps when T is large enough.
    tt_cap = ((pl.cdiv(T, 4) + sub - 1) // sub) * sub
    tt = min(tt, max(sub, tt_cap))
    if tt >= T:
        tt = T                                   # full-extent block is allowed

    grid = (pl.cdiv(T, tt), pl.cdiv(C_pad, ct))

    cost = pl.CostEstimate(
        flops=T * C_pad,
        transcendentals=0,
        bytes_accessed=(2 * T * C_pad + C_pad) * itemsize,
    )

    # Aliasing x2 -> out avoids a separate HBM output allocation; only enable
    # when the caller can donate x (off by default for safety).
    io_alias = {1: 0} if donate_x else {}

    out2 = pl.pallas_call(
        _locked_dropout_kernel,
        out_shape=jax.ShapeDtypeStruct((T, C_pad), x.dtype),
        grid_spec=pltpu.PrefetchScalarGridSpec(
            num_scalar_prefetch=0,
            grid=grid,
            in_specs=[
                pl.BlockSpec((1, ct), lambda t, c: (0, c)),   # resident mask slice
                pl.BlockSpec((tt, ct), lambda t, c: (t, c)),  # x tile
            ],
            out_specs=pl.BlockSpec((tt, ct), lambda t, c: (t, c)),
        ),
        compiler_params=pltpu.CompilerParams(
            dimension_semantics=("parallel", "parallel"),     # megacore-shardable
        ),
        cost_estimate=cost,
        input_output_aliases=io_alias,
    )(mask, x2)

    if C_pad != C:
        out2 = out2[:, :C]
    return out2.reshape(x.shape)


def _reference(x, p, key):
    """Pure-JAX reference using the exact same mask draw as the wrapper."""
    keep_prob = 1.0 - p
    C = math.prod(x.shape[1:]) if x.ndim > 1 else 1
    keep = jax.random.bernoulli(key, keep_prob, (1, C))
    mask = keep.astype(x.dtype) * jnp.asarray(1.0 / keep_prob, dtype=x.dtype)
    return x * mask.reshape((1,) + x.shape[1:])


if __name__ == "__main__":
    key = jax.random.PRNGKey(0)
    kx, kmask, kx2, kmask2, kx3, kmask3 = jax.random.split(key, 6)
    p = 0.5

    # --- case 1: f32, lane-aligned C (T=8, B=4, H=32 -> C=128) ---
    T, B, H = 8, 4, 32
    x = jax.random.normal(kx, (T, B, H), dtype=jnp.float32)
    y = jax.block_until_ready(locked_dropout(x, p=p, key=kmask, training=True))
    assert y.shape == x.shape and y.dtype == x.dtype
    ref = _reference(x, p, kmask)
    assert bool(jnp.allclose(y, ref, atol=1e-6)), "mismatch vs reference (f32 aligned)"

    # Mask implied by the output is identical across the time axis ("locked")
    # and its values are in {0, 1/(1-p)}.
    ratio = jnp.where(jnp.abs(x) > 1e-6, y / x, jnp.nan)
    r0 = ratio[0]
    for t in range(T):
        same = jnp.isnan(ratio[t]) | jnp.isnan(r0) | (jnp.abs(ratio[t] - r0) < 1e-5)
        assert bool(jnp.all(same)), "mask not locked across time axis"
    vals = ratio[~jnp.isnan(ratio)]
    ok = jnp.all((jnp.abs(vals) < 1e-5) | (jnp.abs(vals - 1.0 / (1.0 - p)) < 1e-4))
    assert bool(ok), "mask values not in {0, 1/(1-p)}"

    # eval mode / p==0 passthrough, p==1 zeros
    assert bool(jnp.all(locked_dropout(x, p=p, key=kmask, training=False) == x))
    assert bool(jnp.all(locked_dropout(x, p=0.0, key=kmask, training=True) == x))
    assert bool(jnp.all(locked_dropout(x, p=1.0, key=kmask, training=True) == 0))

    # --- case 2: f32, non-lane-aligned C (T=16, B=3, H=40 -> C=120, padded to 128) ---
    x2 = jax.random.normal(kx2, (16, 3, 40), dtype=jnp.float32)
    y2 = jax.block_until_ready(locked_dropout(x2, p=p, key=kmask2, training=True))
    ref2 = _reference(x2, p, kmask2)
    assert y2.shape == x2.shape
    assert bool(jnp.allclose(y2, ref2, atol=1e-6)), "mismatch vs reference (f32 padded C)"

    # --- case 3: bf16 (exercises dtype-aware sublane rounding) ---
    x3 = jax.random.normal(kx3, (16, 4, 32), dtype=jnp.bfloat16)
    y3 = jax.block_until_ready(locked_dropout(x3, p=p, key=kmask3, training=True))
    ref3 = _reference(x3, p, kmask3)
    assert y3.dtype == jnp.bfloat16
    assert bool(jnp.allclose(y3.astype(jnp.float32), ref3.astype(jnp.float32),
                             atol=1e-2)), "mismatch vs reference (bf16)"

    print("KERNEL_OK")
</pallas_src>

<mosaic_0001>
module attributes {stable_mosaic.version = 11 : i64} {
  func.func @_locked_dropout_kernel(%arg0: i32, %arg1: i32, %arg2: memref<1x128xf32, #tpu.memory_space<vmem>>, %arg3: memref<8x128xf32, #tpu.memory_space<vmem>>, %arg4: memref<8x128xf32, #tpu.memory_space<vmem>>) attributes {dimension_semantics = [#tpu.dimension_semantics<parallel>, #tpu.dimension_semantics<parallel>], iteration_bounds = array<i64: 1, 1>, scalar_prefetch = 0 : i64, scratch_operands = 0 : i64, tpu.core_type = #tpu.core_type<tc>, window_params = [{transform_indices = @transform_0, window_bounds = array<i64: 1, 128>}, {transform_indices = @transform_1, window_bounds = array<i64: 8, 128>}, {transform_indices = @transform_2, window_bounds = array<i64: 8, 128>}]} {
    %c0 = arith.constant 0 : index
    %c0_0 = arith.constant 0 : index
    %0 = vector.load %arg3[%c0, %c0_0] : memref<8x128xf32, #tpu.memory_space<vmem>>, vector<8x128xf32>
    %c0_1 = arith.constant 0 : index
    %c0_2 = arith.constant 0 : index
    %1 = vector.load %arg2[%c0_1, %c0_2] : memref<1x128xf32, #tpu.memory_space<vmem>>, vector<1x128xf32>
    %2 = vector.broadcast %1 : vector<1x128xf32> to vector<8x128xf32>
    %3 = arith.mulf %0, %2 : vector<8x128xf32>
    %c0_3 = arith.constant 0 : index
    %c0_4 = arith.constant 0 : index
    %4 = vector.load %arg4[%c0_3, %c0_4] : memref<8x128xf32, #tpu.memory_space<vmem>>, vector<8x128xf32>
    tpu.vector_store %arg4[%c0_3, %c0_4], %3 {strides = array<i32>} : memref<8x128xf32, #tpu.memory_space<vmem>>, vector<8x128xf32>,
    return
  }
  func.func @transform_0(%arg0: i32, %arg1: i32) -> (i32, i32) {
    %c0_i32 = arith.constant 0 : i32
    %c0_i32_0 = arith.constant 0 : i32
    return %c0_i32, %arg1 : i32, i32
  }
  func.func @transform_1(%arg0: i32, %arg1: i32) -> (i32, i32) {
    %c0_i32 = arith.constant 0 : i32
    return %arg0, %arg1 : i32, i32
  }
  func.func @transform_2(%arg0: i32, %arg1: i32) -> (i32, i32) {
    %c0_i32 = arith.constant 0 : i32
    return %arg0, %arg1 : i32, i32
  }
}

</mosaic_0001>

<llo_original>
// kernel: tpu_custom_call.1
$region0: #{tpu_custom_call.1}
  #allocation0 [shape = 'u32[]', space=smem, size = 0x4, offset = 0x4, fixed_abs, tag = 'smem constant byte address 0x4 - core index']
  #allocation1 [shape = 'u32[144,128]{1,0:T(1,128)}', space=vmem, size = 0x12000, scoped, tag = 'internal scratch']
  %s0 = inlined_call_operand.hbm [shape: f32[1,128], index: 0, kind: input, shape index: {}]
  %s1 = inlined_call_operand.hbm [shape: f32[8,128], index: 1, kind: input, shape index: {}]
  %s2 = inlined_call_operand.hbm [shape: f32[8,128], index: 2, kind: output, shape index: {}]
  %s3 = sld [smem:[#allocation0]]
  $region26: #{tpu_custom_call.1} parent=0
    _
  %s5 = ssub.s32 1, %s3
  %s6 = scalar_select 0, %s5, %s3
  $region1: #{tpu_custom_call.1} parent=0
    #allocation2 [shape = 'u8[512]{0}', space=vmem, size = 0x400, scoped, tag = 'input window, operand 0, single buffered']
    #allocation3 [shape = 's32[1]{0}', space=sflag, size = 0x4, scoped, tag = 'scoped memory for tpu_custom_call.1']
    #allocation4 [shape = 's32[1]{0}', space=sflag, size = 0x4, scoped, tag = 'scoped memory for tpu_custom_call.1']
    #allocation5 [shape = 'u8[4096]{0}', space=vmem, size = 0x1000, scoped, tag = 'input window, operand 1, single buffered']
    #allocation6 [shape = 's32[1]{0}', space=sflag, size = 0x4, scoped, tag = 'scoped memory for tpu_custom_call.1']
    #allocation7 [shape = 'u8[4096]{0}', space=vmem, size = 0x1000, scoped, tag = 'output window, operand 0, single buffered']
    %7 = vsyncpa [#allocation3], 0
    %8 = vsyncpa [#allocation6], 0
    %9 = vsyncpa [#allocation4], 0
    // Predicated region
    $region2: #{tpu_custom_call.1} parent=1 // pred_check
      _
    $region3: #{tpu_custom_call.1} parent=1 // pred_check_branch
      %11 = sbr.rel (0) target = $region5
    $region4: #{tpu_custom_call.1} parent=1 // pred_region
      %s13 = ssub.s32 16, 16
      %14 = vsyncadd [#allocation3], %s13
      %s16 = sshll.u32 [#allocation2], 4
      %s17 = int_to_ptr.vmem [resolvable:$true] %s16
      %19 = dma.hbm_to_vmem [thread:$0]  %s0, 16, %s17, [#allocation3]
    $region5: #{tpu_custom_call.1} parent=1 // pred_fallthru
      _
    // Predicated region
    $region6: #{tpu_custom_call.1} parent=1 // pred_check
      _
    $region7: #{tpu_custom_call.1} parent=1 // pred_check_branch
      %21 = sbr.rel (0) target = $region9
    $region8: #{tpu_custom_call.1} parent=1 // pred_region
      %s23 = ssub.s32 128, 128
      %24 = vsyncadd [#allocation6], %s23
      %s26 = sshll.u32 [#allocation5], 4
      %s27 = int_to_ptr.vmem [resolvable:$true] %s26
      %29 = dma.hbm_to_vmem [thread:$0]  %s1, 128, %s27, [#allocation6]
    $region9: #{tpu_custom_call.1} parent=1 // pred_fallthru
      _
    // Predicated region
    $region10: #{tpu_custom_call.1} parent=1 // pred_check
      _
    $region11: #{tpu_custom_call.1} parent=1 // pred_check_branch
      %31 = sbr.rel (0) target = $region13
    $region12: #{tpu_custom_call.1} parent=1 // pred_region
      %32 = dma.done [#allocation3], 16
    $region13: #{tpu_custom_call.1} parent=1 // pred_fallthru
      _
    // Predicated region
    $region14: #{tpu_custom_call.1} parent=1 // pred_check
      _
    $region15: #{tpu_custom_call.1} parent=1 // pred_check_branch
      %34 = sbr.rel (0) target = $region17
    $region16: #{tpu_custom_call.1} parent=1 // pred_region
      %35 = dma.done [#allocation6], 128
    $region17: #{tpu_custom_call.1} parent=1 // pred_fallthru
      _
    %v36 = vld [vmem:[#allocation5] sm:$0xff]
    %v37 = vld [vmem:[#allocation2] sm:$0x1]
    %v39 = vlaneseq
    %v40 = vshrl.u32 %v39, 7
    %v41 = vsub.s32 0, %v40
    %v42 = vrot.slane %v37, %v41
    %v44 = vmul.f32 %v36, %v42
    %45 = vst [vmem:[#allocation7] sm:$0xff] %v44
    // Predicated region
    $region18: #{tpu_custom_call.1} parent=1 // pred_check
      _
    $region19: #{tpu_custom_call.1} parent=1 // pred_check_branch
      %47 = sbr.rel (0) target = $region21
    $region20: #{tpu_custom_call.1} parent=1 // pred_region
      %s49 = ssub.s32 128, 128
      %50 = vsyncadd [#allocation4], %s49
      %s52 = sshll.u32 [#allocation7], 4
      %s53 = int_to_ptr.vmem [resolvable:$true] %s52
      %55 = dma.vmem_to_hbm [thread:$0]  %s53, 128, %s2, [#allocation4]
    $region21: #{tpu_custom_call.1} parent=1 // pred_fallthru
      _
    // Predicated region
    $region22: #{tpu_custom_call.1} parent=1 // pred_check
      _
    $region23: #{tpu_custom_call.1} parent=1 // pred_check_branch
      %57 = sbr.rel (0) target = $region25
    $region24: #{tpu_custom_call.1} parent=1 // pred_region
      %58 = dma.done [#allocation4], 128
    $region25: #{tpu_custom_call.1} parent=1 // pred_fallthru
      _
    %59 = vsyncpa [#allocation3], 1
    %60 = vsyncpa [#allocation6], 1
    %61 = vsyncpa [#allocation4], 1

</llo_original>
